<compile_context>
chip_gen: v7x
topology: tpu7x:2x2x1
jax: 0.10.0
libtpu: 0.0.40
codegen_flags: <defaults>
</compile_context>

<pallas_src>
import functools

import jax
import jax.numpy as jnp
from jax.experimental import pallas as pl
from jax.experimental.pallas import tpu as pltpu

_LANE = 128        # pad feature dims to lane multiples
_SUBLANE = 8       # pad batch tiles to sublane multiples
_MAX_BATCH_TILE = 512
_BN_EPS = 1e-5
_LEAKY_SLOPE = 0.01


def _round_up(x, m):
    return (x + m - 1) // m * m


# ----------------------------------------------------------------------------
# Fused Pallas kernel: whole MLP per batch tile
# ----------------------------------------------------------------------------
def _make_fused_fc_kernel(n_hidden):
    """Kernel refs: (x, [w, b, scale, shift] * n_hidden, w_head, b_head, out)."""

    def kernel(*refs):
        x_ref = refs[0]
        o_ref = refs[-1]
        h = x_ref[...]                                   # bf16 (TB, F0_pad)
        idx = 1
        for _ in range(n_hidden):
            w_ref, b_ref, s_ref, t_ref = refs[idx:idx + 4]
            idx += 4
            # Linear: bf16 operands on the MXU, f32 accumulation.
            y = jnp.dot(h, w_ref[...], preferred_element_type=jnp.float32)
            y = y + b_ref[...]                           # (1, F_pad) broadcasts
            # Dropout == identity in eval mode.
            # LeakyReLU (negative_slope = 0.01), f32 epilogue.
            y = jnp.where(y >= 0.0, y, _LEAKY_SLOPE * y)
            # Folded BatchNorm1d (eval): y * scale + shift.
            y = y * s_ref[...] + t_ref[...]
            h = y.astype(jnp.bfloat16)                   # next matmul operand
        w_ref, b_ref = refs[idx], refs[idx + 1]
        y = jnp.dot(h, w_ref[...], preferred_element_type=jnp.float32)
        o_ref[...] = y + b_ref[...]

    return kernel


# ----------------------------------------------------------------------------
# Host-side parameter folding / padding
# ----------------------------------------------------------------------------
def prepare_fc_params(params):
    """Fold BN into (scale, shift), pad feature dims to 128, cast weights to bf16."""
    blocks = []
    for (w, b, gamma, beta, rmean, rvar) in params["blocks"]:
        in_d, out_d = w.shape
        in_p, out_p = _round_up(in_d, _LANE), _round_up(out_d, _LANE)
        scale = gamma * jax.lax.rsqrt(rvar + _BN_EPS)
        shift = beta - rmean * scale
        wp = jnp.zeros((in_p, out_p), jnp.bfloat16).at[:in_d, :out_d].set(
            w.astype(jnp.bfloat16))
        bp = jnp.zeros((1, out_p), jnp.float32).at[0, :out_d].set(b)
        sp = jnp.zeros((1, out_p), jnp.float32).at[0, :out_d].set(scale)
        tp = jnp.zeros((1, out_p), jnp.float32).at[0, :out_d].set(shift)
        blocks.append((wp, bp, sp, tp))
    w, b = params["head"]
    in_d, out_d = w.shape
    in_p, out_p = _round_up(in_d, _LANE), _round_up(out_d, _LANE)
    wp = jnp.zeros((in_p, out_p), jnp.bfloat16).at[:in_d, :out_d].set(
        w.astype(jnp.bfloat16))
    bp = jnp.zeros((1, out_p), jnp.float32).at[0, :out_d].set(b)
    return tuple(blocks), (wp, bp), out_d


# ----------------------------------------------------------------------------
# Forward pass: one pallas_call, batch-tiled grid
# ----------------------------------------------------------------------------
@functools.partial(jax.jit, static_argnames=("n_tasks",))
def fc_forward(h, blocks, head, *, n_tasks):
    B, F_in = h.shape
    n_hidden = len(blocks)
    f0_pad = blocks[0][0].shape[0] if n_hidden else head[0].shape[0]
    out_pad = head[0].shape[1]

    # Batch tile: up to 512 rows, sublane aligned; pad B to a multiple of it.
    tb = min(_MAX_BATCH_TILE, _round_up(B, _SUBLANE))
    b_pad = _round_up(B, tb)

    x = jnp.zeros((b_pad, f0_pad), jnp.bfloat16).at[:B, :F_in].set(
        h.astype(jnp.bfloat16))

    flat_params = []
    in_specs = [pl.BlockSpec((tb, f0_pad), lambda i: (i, 0))]   # x tile
    for blk in blocks:
        for p in blk:
            flat_params.append(p)
            in_specs.append(pl.BlockSpec(p.shape, lambda i: (0, 0)))  # resident
    for p in head:
        flat_params.append(p)
        in_specs.append(pl.BlockSpec(p.shape, lambda i: (0, 0)))      # resident

    out = pl.pallas_call(
        _make_fused_fc_kernel(n_hidden),
        out_shape=jax.ShapeDtypeStruct((b_pad, out_pad), jnp.float32),
        grid=(b_pad // tb,),
        in_specs=in_specs,
        out_specs=pl.BlockSpec((tb, out_pad), lambda i: (i, 0)),
        compiler_params=pltpu.CompilerParams(
            dimension_semantics=("parallel",)),
    )(x, *flat_params)

    return out[:B, :n_tasks]


# ----------------------------------------------------------------------------
# Parameter construction (deterministic, mirrors FC.__init__ shapes)
# ----------------------------------------------------------------------------
def init_fc_params(key, graph_dim, hidden_dim, n_layers, n_tasks):
    params = {"blocks": []}
    in_dim = graph_dim
    for i in range(n_layers):
        key, kw, kb, km, kv = jax.random.split(key, 5)
        if i == n_layers - 1:
            out_dim = n_tasks
            # PyTorch stores Linear weight as (out, in); we keep (in, out) so the
            # kernel computes x @ W directly (== x @ weight.T in PyTorch).
            w = jax.random.normal(kw, (in_dim, out_dim), jnp.float32) * 0.1
            b = jax.random.normal(kb, (out_dim,), jnp.float32) * 0.1
            params["head"] = (w, b)
        else:
            out_dim = hidden_dim
            w = jax.random.normal(kw, (in_dim, out_dim), jnp.float32) * 0.1
            b = jax.random.normal(kb, (out_dim,), jnp.float32) * 0.1
            gamma = jnp.ones((out_dim,), jnp.float32)
            beta = jnp.zeros((out_dim,), jnp.float32)
            running_mean = jax.random.normal(km, (out_dim,), jnp.float32) * 0.05
            running_var = (jnp.abs(jax.random.normal(kv, (out_dim,), jnp.float32))
                           * 0.1 + 1.0)
            params["blocks"].append((w, b, gamma, beta, running_mean, running_var))
            in_dim = out_dim
    return params


def fc_reference(h, params):
    """Pure-JAX f32 eval-mode reference."""
    x = h
    for (w, b, gamma, beta, rmean, rvar) in params["blocks"]:
        y = x @ w + b
        y = jnp.where(y >= 0.0, y, _LEAKY_SLOPE * y)
        x = (y - rmean) * jax.lax.rsqrt(rvar + _BN_EPS) * gamma + beta
    w, b = params["head"]
    return x @ w + b


# ----------------------------------------------------------------------------
# Main
# ----------------------------------------------------------------------------
if __name__ == "__main__":
    graph_dim, hidden_dim, n_layers, n_tasks = 16, 32, 3, 4
    batch = 8

    key = jax.random.PRNGKey(0)
    key, kx = jax.random.split(key)
    h = jax.random.normal(kx, (batch, graph_dim), jnp.float32)

    raw = init_fc_params(key, graph_dim, hidden_dim, n_layers, n_tasks)
    blocks, head, out_tasks = prepare_fc_params(raw)

    out = fc_forward(h, blocks, head, n_tasks=out_tasks)
    out = jax.block_until_ready(out)

    assert out.shape == (batch, n_tasks), out.shape
    assert bool(jnp.all(jnp.isfinite(out)))

    # Loose tolerance: kernel uses bf16 matmul operands (f32 accumulation).
    ref = fc_reference(h, raw)
    assert jnp.allclose(out, ref, atol=2e-2, rtol=5e-2), \
        float(jnp.max(jnp.abs(out - ref)))

    print("KERNEL_OK")
</pallas_src>

<mosaic_0001>
module attributes {stable_mosaic.version = 11 : i64} {
  func.func @kernel(%arg0: i32, %arg1: memref<8x128xbf16, #tpu.memory_space<vmem>>, %arg2: memref<128x128xbf16, #tpu.memory_space<vmem>>, %arg3: memref<1x128xf32, #tpu.memory_space<vmem>>, %arg4: memref<1x128xf32, #tpu.memory_space<vmem>>, %arg5: memref<1x128xf32, #tpu.memory_space<vmem>>, %arg6: memref<128x128xbf16, #tpu.memory_space<vmem>>, %arg7: memref<1x128xf32, #tpu.memory_space<vmem>>, %arg8: memref<1x128xf32, #tpu.memory_space<vmem>>, %arg9: memref<1x128xf32, #tpu.memory_space<vmem>>, %arg10: memref<128x128xbf16, #tpu.memory_space<vmem>>, %arg11: memref<1x128xf32, #tpu.memory_space<vmem>>, %arg12: memref<8x128xf32, #tpu.memory_space<vmem>>) attributes {dimension_semantics = [#tpu.dimension_semantics<parallel>], iteration_bounds = array<i64: 1>, scalar_prefetch = 0 : i64, scratch_operands = 0 : i64, tpu.core_type = #tpu.core_type<tc>, window_params = [{transform_indices = @transform_0, window_bounds = array<i64: 8, 128>}, {pipeline_mode = #tpu.pipeline_mode<synchronous>, transform_indices = @transform_1, window_bounds = array<i64: 128, 128>}, {pipeline_mode = #tpu.pipeline_mode<synchronous>, transform_indices = @transform_2, window_bounds = array<i64: 1, 128>}, {pipeline_mode = #tpu.pipeline_mode<synchronous>, transform_indices = @transform_3, window_bounds = array<i64: 1, 128>}, {pipeline_mode = #tpu.pipeline_mode<synchronous>, transform_indices = @transform_4, window_bounds = array<i64: 1, 128>}, {pipeline_mode = #tpu.pipeline_mode<synchronous>, transform_indices = @transform_5, window_bounds = array<i64: 128, 128>}, {pipeline_mode = #tpu.pipeline_mode<synchronous>, transform_indices = @transform_6, window_bounds = array<i64: 1, 128>}, {pipeline_mode = #tpu.pipeline_mode<synchronous>, transform_indices = @transform_7, window_bounds = array<i64: 1, 128>}, {pipeline_mode = #tpu.pipeline_mode<synchronous>, transform_indices = @transform_8, window_bounds = array<i64: 1, 128>}, {pipeline_mode = #tpu.pipeline_mode<synchronous>, transform_indices = @transform_9, window_bounds = array<i64: 128, 128>}, {pipeline_mode = #tpu.pipeline_mode<synchronous>, transform_indices = @transform_10, window_bounds = array<i64: 1, 128>}, {transform_indices = @transform_11, window_bounds = array<i64: 8, 128>}]} {
    %c0 = arith.constant 0 : index
    %c0_0 = arith.constant 0 : index
    %0 = vector.load %arg1[%c0, %c0_0] : memref<8x128xbf16, #tpu.memory_space<vmem>>, vector<8x128xbf16>
    %c0_1 = arith.constant 0 : index
    %c0_2 = arith.constant 0 : index
    %1 = vector.load %arg2[%c0_1, %c0_2] : memref<128x128xbf16, #tpu.memory_space<vmem>>, vector<128x128xbf16>
    %cst = arith.constant dense<0.000000e+00> : vector<8x128xf32>
    %2 = tpu.matmul %0, %1, %cst {dimension_numbers = #tpu.dot_dimension_numbers<[1], [0], [0], [1], [0, 0, 1, 1], [], []>} : vector<8x128xbf16>, vector<128x128xbf16>, vector<8x128xf32> -> vector<8x128xf32>
    %c0_3 = arith.constant 0 : index
    %c0_4 = arith.constant 0 : index
    %3 = vector.load %arg3[%c0_3, %c0_4] : memref<1x128xf32, #tpu.memory_space<vmem>>, vector<1x128xf32>
    %4 = vector.broadcast %3 : vector<1x128xf32> to vector<8x128xf32>
    %5 = arith.addf %2, %4 : vector<8x128xf32>
    %cst_5 = arith.constant 0.000000e+00 : f32
    %6 = vector.broadcast %cst_5 : f32 to vector<8x128xf32>
    %7 = arith.cmpf oge, %5, %6 : vector<8x128xf32>
    %cst_6 = arith.constant 0.00999999977 : f32
    %8 = vector.broadcast %cst_6 : f32 to vector<8x128xf32>
    %9 = arith.mulf %8, %5 : vector<8x128xf32>
    %10 = arith.select %7, %5, %9 : vector<8x128xi1>, vector<8x128xf32>
    %c0_7 = arith.constant 0 : index
    %c0_8 = arith.constant 0 : index
    %11 = vector.load %arg4[%c0_7, %c0_8] : memref<1x128xf32, #tpu.memory_space<vmem>>, vector<1x128xf32>
    %12 = vector.broadcast %11 : vector<1x128xf32> to vector<8x128xf32>
    %13 = arith.mulf %10, %12 : vector<8x128xf32>
    %c0_9 = arith.constant 0 : index
    %c0_10 = arith.constant 0 : index
    %14 = vector.load %arg5[%c0_9, %c0_10] : memref<1x128xf32, #tpu.memory_space<vmem>>, vector<1x128xf32>
    %15 = vector.broadcast %14 : vector<1x128xf32> to vector<8x128xf32>
    %16 = arith.addf %13, %15 : vector<8x128xf32>
    %17 = arith.truncf %16 : vector<8x128xf32> to vector<8x128xbf16>
    %c0_11 = arith.constant 0 : index
    %c0_12 = arith.constant 0 : index
    %18 = vector.load %arg6[%c0_11, %c0_12] : memref<128x128xbf16, #tpu.memory_space<vmem>>, vector<128x128xbf16>
    %cst_13 = arith.constant dense<0.000000e+00> : vector<8x128xf32>
    %19 = tpu.matmul %17, %18, %cst_13 {dimension_numbers = #tpu.dot_dimension_numbers<[1], [0], [0], [1], [0, 0, 1, 1], [], []>} : vector<8x128xbf16>, vector<128x128xbf16>, vector<8x128xf32> -> vector<8x128xf32>
    %c0_14 = arith.constant 0 : index
    %c0_15 = arith.constant 0 : index
    %20 = vector.load %arg7[%c0_14, %c0_15] : memref<1x128xf32, #tpu.memory_space<vmem>>, vector<1x128xf32>
    %21 = vector.broadcast %20 : vector<1x128xf32> to vector<8x128xf32>
    %22 = arith.addf %19, %21 : vector<8x128xf32>
    %cst_16 = arith.constant 0.000000e+00 : f32
    %23 = vector.broadcast %cst_16 : f32 to vector<8x128xf32>
    %24 = arith.cmpf oge, %22, %23 : vector<8x128xf32>
    %cst_17 = arith.constant 0.00999999977 : f32
    %25 = vector.broadcast %cst_17 : f32 to vector<8x128xf32>
    %26 = arith.mulf %25, %22 : vector<8x128xf32>
    %27 = arith.select %24, %22, %26 : vector<8x128xi1>, vector<8x128xf32>
    %c0_18 = arith.constant 0 : index
    %c0_19 = arith.constant 0 : index
    %28 = vector.load %arg8[%c0_18, %c0_19] : memref<1x128xf32, #tpu.memory_space<vmem>>, vector<1x128xf32>
    %29 = vector.broadcast %28 : vector<1x128xf32> to vector<8x128xf32>
    %30 = arith.mulf %27, %29 : vector<8x128xf32>
    %c0_20 = arith.constant 0 : index
    %c0_21 = arith.constant 0 : index
    %31 = vector.load %arg9[%c0_20, %c0_21] : memref<1x128xf32, #tpu.memory_space<vmem>>, vector<1x128xf32>
    %32 = vector.broadcast %31 : vector<1x128xf32> to vector<8x128xf32>
    %33 = arith.addf %30, %32 : vector<8x128xf32>
    %34 = arith.truncf %33 : vector<8x128xf32> to vector<8x128xbf16>
    %c0_22 = arith.constant 0 : index
    %c0_23 = arith.constant 0 : index
    %35 = vector.load %arg10[%c0_22, %c0_23] : memref<128x128xbf16, #tpu.memory_space<vmem>>, vector<128x128xbf16>
    %cst_24 = arith.constant dense<0.000000e+00> : vector<8x128xf32>
    %36 = tpu.matmul %34, %35, %cst_24 {dimension_numbers = #tpu.dot_dimension_numbers<[1], [0], [0], [1], [0, 0, 1, 1], [], []>} : vector<8x128xbf16>, vector<128x128xbf16>, vector<8x128xf32> -> vector<8x128xf32>
    %c0_25 = arith.constant 0 : index
    %c0_26 = arith.constant 0 : index
    %37 = vector.load %arg11[%c0_25, %c0_26] : memref<1x128xf32, #tpu.memory_space<vmem>>, vector<1x128xf32>
    %38 = vector.broadcast %37 : vector<1x128xf32> to vector<8x128xf32>
    %39 = arith.addf %36, %38 : vector<8x128xf32>
    %c0_27 = arith.constant 0 : index
    %c0_28 = arith.constant 0 : index
    %40 = vector.load %arg12[%c0_27, %c0_28] : memref<8x128xf32, #tpu.memory_space<vmem>>, vector<8x128xf32>
    tpu.vector_store %arg12[%c0_27, %c0_28], %39 {strides = array<i32>} : memref<8x128xf32, #tpu.memory_space<vmem>>, vector<8x128xf32>,
    return
  }
  func.func @transform_0(%arg0: i32) -> (i32, i32) {
    %c0_i32 = arith.constant 0 : i32
    %c0_i32_0 = arith.constant 0 : i32
    return %arg0, %c0_i32 : i32, i32
  }
  func.func @transform_1(%arg0: i32) -> (i32, i32) {
    %c0_i32 = arith.constant 0 : i32
    %c0_i32_0 = arith.constant 0 : i32
    %c0_i32_1 = arith.constant 0 : i32
    return %c0_i32, %c0_i32_0 : i32, i32
  }
  func.func @transform_2(%arg0: i32) -> (i32, i32) {
    %c0_i32 = arith.constant 0 : i32
    %c0_i32_0 = arith.constant 0 : i32
    %c0_i32_1 = arith.constant 0 : i32
    return %c0_i32, %c0_i32_0 : i32, i32
  }
  func.func @transform_3(%arg0: i32) -> (i32, i32) {
    %c0_i32 = arith.constant 0 : i32
    %c0_i32_0 = arith.constant 0 : i32
    %c0_i32_1 = arith.constant 0 : i32
    return %c0_i32, %c0_i32_0 : i32, i32
  }
  func.func @transform_4(%arg0: i32) -> (i32, i32) {
    %c0_i32 = arith.constant 0 : i32
    %c0_i32_0 = arith.constant 0 : i32
    %c0_i32_1 = arith.constant 0 : i32
    return %c0_i32, %c0_i32_0 : i32, i32
  }
  func.func @transform_5(%arg0: i32) -> (i32, i32) {
    %c0_i32 = arith.constant 0 : i32
    %c0_i32_0 = arith.constant 0 : i32
    %c0_i32_1 = arith.constant 0 : i32
    return %c0_i32, %c0_i32_0 : i32, i32
  }
  func.func @transform_6(%arg0: i32) -> (i32, i32) {
    %c0_i32 = arith.constant 0 : i32
    %c0_i32_0 = arith.constant 0 : i32
    %c0_i32_1 = arith.constant 0 : i32
    return %c0_i32, %c0_i32_0 : i32, i32
  }
  func.func @transform_7(%arg0: i32) -> (i32, i32) {
    %c0_i32 = arith.constant 0 : i32
    %c0_i32_0 = arith.constant 0 : i32
    %c0_i32_1 = arith.constant 0 : i32
    return %c0_i32, %c0_i32_0 : i32, i32
  }
  func.func @transform_8(%arg0: i32) -> (i32, i32) {
    %c0_i32 = arith.constant 0 : i32
    %c0_i32_0 = arith.constant 0 : i32
    %c0_i32_1 = arith.constant 0 : i32
    return %c0_i32, %c0_i32_0 : i32, i32
  }
  func.func @transform_9(%arg0: i32) -> (i32, i32) {
    %c0_i32 = arith.constant 0 : i32
    %c0_i32_0 = arith.constant 0 : i32
    %c0_i32_1 = arith.constant 0 : i32
    return %c0_i32, %c0_i32_0 : i32, i32
  }
  func.func @transform_10(%arg0: i32) -> (i32, i32) {
    %c0_i32 = arith.constant 0 : i32
    %c0_i32_0 = arith.constant 0 : i32
    %c0_i32_1 = arith.constant 0 : i32
    return %c0_i32, %c0_i32_0 : i32, i32
  }
  func.func @transform_11(%arg0: i32) -> (i32, i32) {
    %c0_i32 = arith.constant 0 : i32
    %c0_i32_0 = arith.constant 0 : i32
    return %arg0, %c0_i32 : i32, i32
  }
}

</mosaic_0001>

<llo_original>
// kernel: fc_forward.1
$region0: #{fc_forward.1}
  #allocation0 [shape = 'u32[]', space=smem, size = 0x4, offset = 0x4, fixed_abs, tag = 'smem constant byte address 0x4 - core index']
  #allocation1 [shape = 'u32[144,128]{1,0:T(1,128)}', space=vmem, size = 0x12000, scoped, tag = 'internal scratch']
  %s0 = inlined_call_operand.vmem [shape: bf16[8,128], index: 0, kind: input, shape index: {}]
  %s1 = inlined_call_operand.hbm [shape: bf16[128,128], index: 1, kind: input, shape index: {}]
  %s2 = inlined_call_operand.vmem [shape: f32[1,128], index: 2, kind: input, shape index: {}]
  %s3 = inlined_call_operand.vmem [shape: f32[1,128], index: 3, kind: input, shape index: {}]
  %s4 = inlined_call_operand.vmem [shape: f32[1,128], index: 4, kind: input, shape index: {}]
  %s5 = inlined_call_operand.hbm [shape: bf16[128,128], index: 5, kind: input, shape index: {}]
  %s6 = inlined_call_operand.vmem [shape: f32[1,128], index: 6, kind: input, shape index: {}]
  %s7 = inlined_call_operand.vmem [shape: f32[1,128], index: 7, kind: input, shape index: {}]
  %s8 = inlined_call_operand.vmem [shape: f32[1,128], index: 8, kind: input, shape index: {}]
  %s9 = inlined_call_operand.hbm [shape: bf16[128,128], index: 9, kind: input, shape index: {}]
  %s10 = inlined_call_operand.vmem [shape: f32[1,128], index: 10, kind: input, shape index: {}]
  %s11 = inlined_call_operand.vmem [shape: f32[8,128], index: 11, kind: output, shape index: {}]
  %s12 = sld [smem:[#allocation0]]
  $region66: #{fc_forward.1} parent=0
    _
  %s14 = ssub.s32 1, %s12
  %s15 = scalar_select 0, %s14, %s12
  $region1: #{fc_forward.1} parent=0
    #allocation2 [shape = 'u8[32768]{0}', space=vmem, size = 0x8000, scoped, tag = 'input window, operand 1, single buffered']
    #allocation3 [shape = 's32[1]{0}', space=sflag, size = 0x4, scoped, tag = 'scoped memory for fc_forward.1']
    #allocation4 [shape = 'u8[32768]{0}', space=vmem, size = 0x8000, scoped, tag = 'input window, operand 5, single buffered']
    #allocation5 [shape = 's32[1]{0}', space=sflag, size = 0x4, scoped, tag = 'scoped memory for fc_forward.1']
    #allocation6 [shape = 'u8[32768]{0}', space=vmem, size = 0x8000, scoped, tag = 'input window, operand 9, single buffered']
    %16 = vsyncpa [#allocation3], 0
    %17 = vsyncpa [#allocation5], 0
    // Predicated region
    $region2: #{fc_forward.1} parent=1 // pred_check
      _
    $region3: #{fc_forward.1} parent=1 // pred_check_branch
      %19 = sbr.rel (0) target = $region5
    $region4: #{fc_forward.1} parent=1 // pred_region
      _
    $region5: #{fc_forward.1} parent=1 // pred_fallthru
      _
    // Predicated region
    $region6: #{fc_forward.1} parent=1 // pred_check
      _
    $region7: #{fc_forward.1} parent=1 // pred_check_branch
      %21 = sbr.rel (0) target = $region9
    $region8: #{fc_forward.1} parent=1 // pred_region
      %s23 = ssub.s32 1024, 1024
      %24 = vsyncadd [#allocation3], %s23
      %s25 = sshll.u32 [#allocation2], 4
      %s26 = int_to_ptr.vmem [resolvable:$true] %s25
      %31 = dma.hbm_to_vmem [thread:$0]  %s1, 1024, %s26, [#allocation3], 64, 64, 4
    $region9: #{fc_forward.1} parent=1 // pred_fallthru
      _
    // Predicated region
    $region10: #{fc_forward.1} parent=1 // pred_check
      _
    $region11: #{fc_forward.1} parent=1 // pred_check_branch
      %33 = sbr.rel (0) target = $region13
    $region12: #{fc_forward.1} parent=1 // pred_region
      _
    $region13: #{fc_forward.1} parent=1 // pred_fallthru
      _
    // Predicated region
    $region14: #{fc_forward.1} parent=1 // pred_check
      _
    $region15: #{fc_forward.1} parent=1 // pred_check_branch
      %35 = sbr.rel (0) target = $region17
    $region16: #{fc_forward.1} parent=1 // pred_region
      _
    $region17: #{fc_forward.1} parent=1 // pred_fallthru
      _
    // Predicated region
    $region18: #{fc_forward.1} parent=1 // pred_check
      _
    $region19: #{fc_forward.1} parent=1 // pred_check_branch
      %37 = sbr.rel (0) target = $region21
    $region20: #{fc_forward.1} parent=1 // pred_region
      _
    $region21: #{fc_forward.1} parent=1 // pred_fallthru
      _
    // Predicated region
    $region22: #{fc_forward.1} parent=1 // pred_check
      _
    $region23: #{fc_forward.1} parent=1 // pred_check_branch
      %39 = sbr.rel (0) target = $region25
    $region24: #{fc_forward.1} parent=1 // pred_region
      %s41 = ssub.s32 1024, 1024
      %42 = vsyncadd [#allocation5], %s41
      %s43 = sshll.u32 [#allocation4], 4
      %s44 = int_to_ptr.vmem [resolvable:$true] %s43
      %49 = dma.hbm_to_vmem [thread:$0]  %s5, 1024, %s44, [#allocation5], 64, 64, 4
    $region25: #{fc_forward.1} parent=1 // pred_fallthru
      _
    // Predicated region
    $region26: #{fc_forward.1} parent=1 // pred_check
      _
    $region27: #{fc_forward.1} parent=1 // pred_check_branch
      %51 = sbr.rel (0) target = $region29
    $region28: #{fc_forward.1} parent=1 // pred_region
      _
    $region29: #{fc_forward.1} parent=1 // pred_fallthru
      _
    // Predicated region
    $region30: #{fc_forward.1} parent=1 // pred_check
      _
    $region31: #{fc_forward.1} parent=1 // pred_check_branch
      %53 = sbr.rel (0) target = $region33
    $region32: #{fc_forward.1} parent=1 // pred_region
      _
    $region33: #{fc_forward.1} parent=1 // pred_fallthru
      _
    // Predicated region
    $region34: #{fc_forward.1} parent=1 // pred_check
      _
    $region35: #{fc_forward.1} parent=1 // pred_check_branch
      %55 = sbr.rel (0) target = $region37
    $region36: #{fc_forward.1} parent=1 // pred_region
      _
    $region37: #{fc_forward.1} parent=1 // pred_fallthru
      _
    // Predicated region
    $region38: #{fc_forward.1} parent=1 // pred_check
      _
    $region39: #{fc_forward.1} parent=1 // pred_check_branch
      %57 = sbr.rel (0) target = $region41
    $region40: #{fc_forward.1} parent=1 // pred_region
      %s59 = ssub.s32 1024, 1024
      %60 = vsyncadd [#allocation5], %s59
      %s61 = sshll.u32 [#allocation6], 4
      %s62 = int_to_ptr.vmem [resolvable:$true] %s61
      %67 = dma.hbm_to_vmem [thread:$0]  %s9, 1024, %s62, [#allocation5], 64, 64, 4
    $region41: #{fc_forward.1} parent=1 // pred_fallthru
      _
    // Predicated region
    $region42: #{fc_forward.1} parent=1 // pred_check
      _
    $region43: #{fc_forward.1} parent=1 // pred_check_branch
      %69 = sbr.rel (0) target = $region45
    $region44: #{fc_forward.1} parent=1 // pred_region
      _
    $region45: #{fc_forward.1} parent=1 // pred_fallthru
      _
    // Predicated region
    $region46: #{fc_forward.1} parent=1 // pred_check
      _
    $region47: #{fc_forward.1} parent=1 // pred_check_branch
      %71 = sbr.rel (0) target = $region49
    $region48: #{fc_forward.1} parent=1 // pred_region
      %72 = dma.done [#allocation3], 1024
    $region49: #{fc_forward.1} parent=1 // pred_fallthru
      _
    // Predicated region
    $region50: #{fc_forward.1} parent=1 // pred_check
      _
    $region51: #{fc_forward.1} parent=1 // pred_check_branch
      %74 = sbr.rel (0) target = $region53
    $region52: #{fc_forward.1} parent=1 // pred_region
      %75 = dma.done [#allocation5], 1024
    $region53: #{fc_forward.1} parent=1 // pred_fallthru
      _
    // Predicated region
    $region54: #{fc_forward.1} parent=1 // pred_check
      _
    $region55: #{fc_forward.1} parent=1 // pred_check_branch
      %77 = sbr.rel (0) target = $region57
    $region56: #{fc_forward.1} parent=1 // pred_region
      %78 = dma.done [#allocation5], 1024
    $region57: #{fc_forward.1} parent=1 // pred_fallthru
      _
    %v80 = vld [vmem:[%s0] sm:$0xf]
    %v81 = vld [vmem:[#allocation2] sm:$0xf]
    %v82 = vld [vmem:[#allocation2 + $0x4] sm:$0xf]
    %v83 = vld [vmem:[#allocation2 + $0x8] sm:$0xf]
    %v84 = vld [vmem:[#allocation2 + $0xc] sm:$0xf]
    %v85 = vld [vmem:[#allocation2 + $0x10] sm:$0xf]
    %v86 = vld [vmem:[#allocation2 + $0x14] sm:$0xf]
    %v87 = vld [vmem:[#allocation2 + $0x18] sm:$0xf]
    %v88 = vld [vmem:[#allocation2 + $0x1c] sm:$0xf]
    %v89 = vld [vmem:[#allocation2 + $0x20] sm:$0xf]
    %v90 = vld [vmem:[#allocation2 + $0x24] sm:$0xf]
    %v91 = vld [vmem:[#allocation2 + $0x28] sm:$0xf]
    %v92 = vld [vmem:[#allocation2 + $0x2c] sm:$0xf]
    %v93 = vld [vmem:[#allocation2 + $0x30] sm:$0xf]
    %v94 = vld [vmem:[#allocation2 + $0x34] sm:$0xf]
    %v95 = vld [vmem:[#allocation2 + $0x38] sm:$0xf]
    %v96 = vld [vmem:[#allocation2 + $0x3c] sm:$0xf]
    %v97 = vld [vmem:[%s2] sm:$0x1]
    %v99 = vlaneseq
    %v100 = vshrl.u32 %v99, 7
    %v101 = vsub.s32 0, %v100
    %v102 = vrot.slane %v97, %v101
    %v120 = vunpack.c.l.b16 %v81
    %v121 = vunpack.c.l.b16 %v82
    %v122 = vunpack.c.l.b16 %v83
    %v123 = vunpack.c.l.b16 %v84
    %v124 = vunpack.c.l.b16 %v85
    %v125 = vunpack.c.l.b16 %v86
    %v126 = vunpack.c.l.b16 %v87
    %v127 = vunpack.c.l.b16 %v88
    %v128 = vunpack.c.l.b16 %v89
    %v129 = vunpack.c.l.b16 %v90
    %v130 = vunpack.c.l.b16 %v91
    %v131 = vunpack.c.l.b16 %v92
    %v132 = vunpack.c.l.b16 %v93
    %v133 = vunpack.c.l.b16 %v94
    %v134 = vunpack.c.l.b16 %v95
    %v135 = vunpack.c.l.b16 %v96
    %v136 = vpack.c.b16 %v121, %v120
    %v137 = vpack.c.b16 %v123, %v122
    %v138 = vpack.c.b16 %v125, %v124
    %v139 = vpack.c.b16 %v127, %v126
    %v140 = vpack.c.b16 %v129, %v128
    %v141 = vpack.c.b16 %v131, %v130
    %v142 = vpack.c.b16 %v133, %v132
    %v143 = vpack.c.b16 %v135, %v134
    %152 = vmatprep.subr.bf16.mxu0 0
    %153 = vmatpush1.bf16.msra.mxu0 %v136
    %154 = vmatprep.subr.bf16.mxu0 0
    %155 = vmatpush1.bf16.msra.mxu0 %v137
    %156 = vmatprep.subr.bf16.mxu0 0
    %157 = vmatpush1.bf16.msra.mxu0 %v138
    %158 = vmatprep.subr.bf16.mxu0 0
    %159 = vmatpush1.bf16.msra.mxu0 %v139
    %160 = vmatprep.subr.bf16.mxu0 0
    %161 = vmatpush1.bf16.msra.mxu0 %v140
    %162 = vmatprep.subr.bf16.mxu0 0
    %163 = vmatpush1.bf16.msra.mxu0 %v141
    %164 = vmatprep.subr.bf16.mxu0 0
    %165 = vmatpush1.bf16.msra.mxu0 %v142
    %166 = vmatprep.subr.bf16.mxu0 0
    %167 = vmatpush1.bf16.msra.mxu0 %v143
    %168 = vmatprep.subr.bf16.mxu0 0
    %169 = vmatpush1.bf16.msra.mxu0 0
    %170 = vmatprep.subr.bf16.mxu0 0
    %171 = vmatpush1.bf16.msra.mxu0 0
    %172 = vmatprep.subr.bf16.mxu0 0
    %173 = vmatpush1.bf16.msra.mxu0 0
    %174 = vmatprep.subr.bf16.mxu0 0
    %175 = vmatpush1.bf16.msra.mxu0 0
    %176 = vmatprep.subr.bf16.mxu0 0
    %177 = vmatpush1.bf16.msra.mxu0 0
    %178 = vmatprep.subr.bf16.mxu0 0
    %179 = vmatpush1.bf16.msra.mxu0 0
    %180 = vmatprep.subr.bf16.mxu0 0
    %181 = vmatpush1.bf16.msra.mxu0 0
    %182 = vmatprep.subr.bf16.mxu0 0
    %183 = vmatpush1.bf16.msra.mxu0 0
    %184 = vmatprep.mubr.bf16.mxu0 0
    %185 = vmatmul.mubr.bf16.gmra.mrb[0].mxu0 %v80
    %v186 = vpop.f32.mrb[0].mxu0
    %v187 = vadd.f32 %v102, %v186
    %v188 = vpop.f32.mrb[0].mxu0
    %v189 = vpop.f32.mrb[0].mxu0
    %v190 = vpop.f32.mrb[0].mxu0
    %191 = vdwg.mxu0
    %vm192 = vcmp.ge.f32.partialorder %v187, 0.0
    %v193 = vmul.f32 %v187, 0.01
    %v194 = vsel %vm192, %v187, %v193
    %v195 = vld [vmem:[%s3] sm:$0x1]
    %v197 = vlaneseq
    %v198 = vshrl.u32 %v197, 7
    %v199 = vsub.s32 0, %v198
    %v200 = vrot.slane %v195, %v199
    %v202 = vmul.f32 %v194, %v200
    %v203 = vld [vmem:[%s4] sm:$0x1]
    %v205 = vlaneseq
    %v206 = vshrl.u32 %v205, 7
    %v207 = vsub.s32 0, %v206
    %v208 = vrot.slane %v203, %v207
    %v210 = vadd.f32 %v202, %v208
    %v211 = vpack.c.bf16 %v210, %v210
    %v212 = vld [vmem:[#allocation4] sm:$0xf]
    %v213 = vld [vmem:[#allocation4 + $0x4] sm:$0xf]
    %v214 = vld [vmem:[#allocation4 + $0x8] sm:$0xf]
    %v215 = vld [vmem:[#allocation4 + $0xc] sm:$0xf]
    %v216 = vld [vmem:[#allocation4 + $0x10] sm:$0xf]
    %v217 = vld [vmem:[#allocation4 + $0x14] sm:$0xf]
    %v218 = vld [vmem:[#allocation4 + $0x18] sm:$0xf]
    %v219 = vld [vmem:[#allocation4 + $0x1c] sm:$0xf]
    %v220 = vld [vmem:[#allocation4 + $0x20] sm:$0xf]
    %v221 = vld [vmem:[#allocation4 + $0x24] sm:$0xf]
    %v222 = vld [vmem:[#allocation4 + $0x28] sm:$0xf]
    %v223 = vld [vmem:[#allocation4 + $0x2c] sm:$0xf]
    %v224 = vld [vmem:[#allocation4 + $0x30] sm:$0xf]
    %v225 = vld [vmem:[#allocation4 + $0x34] sm:$0xf]
    %v226 = vld [vmem:[#allocation4 + $0x38] sm:$0xf]
    %v227 = vld [vmem:[#allocation4 + $0x3c] sm:$0xf]
    %v228 = vld [vmem:[%s6] sm:$0x1]
    %v230 = vlaneseq
    %v231 = vshrl.u32 %v230, 7
    %v232 = vsub.s32 0, %v231
    %v233 = vrot.slane %v228, %v232
    %v251 = vunpack.c.l.b16 %v212
    %v252 = vunpack.c.l.b16 %v213
    %v253 = vunpack.c.l.b16 %v214
    %v254 = vunpack.c.l.b16 %v215
    %v255 = vunpack.c.l.b16 %v216
    %v256 = vunpack.c.l.b16 %v217
    %v257 = vunpack.c.l.b16 %v218
    %v258 = vunpack.c.l.b16 %v219
    %v259 = vunpack.c.l.b16 %v220
    %v260 = vunpack.c.l.b16 %v221
    %v261 = vunpack.c.l.b16 %v222
    %v262 = vunpack.c.l.b16 %v223
    %v263 = vunpack.c.l.b16 %v224
    %v264 = vunpack.c.l.b16 %v225
    %v265 = vunpack.c.l.b16 %v226
    %v266 = vunpack.c.l.b16 %v227
    %v267 = vpack.c.b16 %v252, %v251
    %v268 = vpack.c.b16 %v254, %v253
    %v269 = vpack.c.b16 %v256, %v255
    %v270 = vpack.c.b16 %v258, %v257
    %v271 = vpack.c.b16 %v260, %v259
    %v272 = vpack.c.b16 %v262, %v261
    %v273 = vpack.c.b16 %v264, %v263
    %v274 = vpack.c.b16 %v266, %v265
    %283 = vmatprep.subr.bf16.mxu0 0
    %284 = vmatpush1.bf16.msra.mxu0 %v267
    %285 = vmatprep.subr.bf16.mxu0 0
    %286 = vmatpush1.bf16.msra.mxu0 %v268
    %287 = vmatprep.subr.bf16.mxu0 0
    %288 = vmatpush1.bf16.msra.mxu0 %v269
    %289 = vmatprep.subr.bf16.mxu0 0
    %290 = vmatpush1.bf16.msra.mxu0 %v270
    %291 = vmatprep.subr.bf16.mxu0 0
    %292 = vmatpush1.bf16.msra.mxu0 %v271
    %293 = vmatprep.subr.bf16.mxu0 0
    %294 = vmatpush1.bf16.msra.mxu0 %v272
    %295 = vmatprep.subr.bf16.mxu0 0
    %296 = vmatpush1.bf16.msra.mxu0 %v273
    %297 = vmatprep.subr.bf16.mxu0 0
    %298 = vmatpush1.bf16.msra.mxu0 %v274
    %299 = vmatprep.subr.bf16.mxu0 0
    %300 = vmatpush1.bf16.msra.mxu0 0
    %301 = vmatprep.subr.bf16.mxu0 0
    %302 = vmatpush1.bf16.msra.mxu0 0
    %303 = vmatprep.subr.bf16.mxu0 0
    %304 = vmatpush1.bf16.msra.mxu0 0
    %305 = vmatprep.subr.bf16.mxu0 0
    %306 = vmatpush1.bf16.msra.mxu0 0
    %307 = vmatprep.subr.bf16.mxu0 0
    %308 = vmatpush1.bf16.msra.mxu0 0
    %309 = vmatprep.subr.bf16.mxu0 0
    %310 = vmatpush1.bf16.msra.mxu0 0
    %311 = vmatprep.subr.bf16.mxu0 0
    %312 = vmatpush1.bf16.msra.mxu0 0
    %313 = vmatprep.subr.bf16.mxu0 0
    %314 = vmatpush1.bf16.msra.mxu0 0
    %315 = vmatprep.mubr.bf16.mxu0 0
    %316 = vmatmul.mubr.bf16.gmra.mrb[0].mxu0 %v211
    %v317 = vpop.f32.mrb[0].mxu0
    %v318 = vadd.f32 %v233, %v317
    %v319 = vpop.f32.mrb[0].mxu0
    %v320 = vpop.f32.mrb[0].mxu0
    %v321 = vpop.f32.mrb[0].mxu0
    %322 = vdwg.mxu0
    %vm323 = vcmp.ge.f32.partialorder %v318, 0.0
    %v324 = vmul.f32 %v318, 0.01
    %v325 = vsel %vm323, %v318, %v324
    %v326 = vld [vmem:[%s7] sm:$0x1]
    %v328 = vlaneseq
    %v329 = vshrl.u32 %v328, 7
    %v330 = vsub.s32 0, %v329
    %v331 = vrot.slane %v326, %v330
    %v333 = vmul.f32 %v325, %v331
    %v334 = vld [vmem:[%s8] sm:$0x1]
    %v336 = vlaneseq
    %v337 = vshrl.u32 %v336, 7
    %v338 = vsub.s32 0, %v337
    %v339 = vrot.slane %v334, %v338
    %v341 = vadd.f32 %v333, %v339
    %v342 = vpack.c.bf16 %v341, %v341
    %v343 = vld [vmem:[#allocation6] sm:$0xf]
    %v344 = vld [vmem:[#allocation6 + $0x4] sm:$0xf]
    %v345 = vld [vmem:[#allocation6 + $0x8] sm:$0xf]
    %v346 = vld [vmem:[#allocation6 + $0xc] sm:$0xf]
    %v347 = vld [vmem:[#allocation6 + $0x10] sm:$0xf]
    %v348 = vld [vmem:[#allocation6 + $0x14] sm:$0xf]
    %v349 = vld [vmem:[#allocation6 + $0x18] sm:$0xf]
    %v350 = vld [vmem:[#allocation6 + $0x1c] sm:$0xf]
    %v351 = vld [vmem:[#allocation6 + $0x20] sm:$0xf]
    %v352 = vld [vmem:[#allocation6 + $0x24] sm:$0xf]
    %v353 = vld [vmem:[#allocation6 + $0x28] sm:$0xf]
    %v354 = vld [vmem:[#allocation6 + $0x2c] sm:$0xf]
    %v355 = vld [vmem:[#allocation6 + $0x30] sm:$0xf]
    %v356 = vld [vmem:[#allocation6 + $0x34] sm:$0xf]
    %v357 = vld [vmem:[#allocation6 + $0x38] sm:$0xf]
    %v358 = vld [vmem:[#allocation6 + $0x3c] sm:$0xf]
    %v359 = vld [vmem:[%s10] sm:$0x1]
    %v361 = vlaneseq
    %v362 = vshrl.u32 %v361, 7
    %v363 = vsub.s32 0, %v362
    %v364 = vrot.slane %v359, %v363
    %v382 = vunpack.c.l.b16 %v343
    %v383 = vunpack.c.l.b16 %v344
    %v384 = vunpack.c.l.b16 %v345
    %v385 = vunpack.c.l.b16 %v346
    %v386 = vunpack.c.l.b16 %v347
    %v387 = vunpack.c.l.b16 %v348
    %v388 = vunpack.c.l.b16 %v349
    %v389 = vunpack.c.l.b16 %v350
    %v390 = vunpack.c.l.b16 %v351
    %v391 = vunpack.c.l.b16 %v352
    %v392 = vunpack.c.l.b16 %v353
    %v393 = vunpack.c.l.b16 %v354
    %v394 = vunpack.c.l.b16 %v355
    %v395 = vunpack.c.l.b16 %v356
    %v396 = vunpack.c.l.b16 %v357
    %v397 = vunpack.c.l.b16 %v358
    %v398 = vpack.c.b16 %v383, %v382
    %v399 = vpack.c.b16 %v385, %v384
    %v400 = vpack.c.b16 %v387, %v386
    %v401 = vpack.c.b16 %v389, %v388
    %v402 = vpack.c.b16 %v391, %v390
    %v403 = vpack.c.b16 %v393, %v392
    %v404 = vpack.c.b16 %v395, %v394
    %v405 = vpack.c.b16 %v397, %v396
    %414 = vmatprep.subr.bf16.mxu0 0
    %415 = vmatpush1.bf16.msra.mxu0 %v398
    %416 = vmatprep.subr.bf16.mxu0 0
    %417 = vmatpush1.bf16.msra.mxu0 %v399
    %418 = vmatprep.subr.bf16.mxu0 0
    %419 = vmatpush1.bf16.msra.mxu0 %v400
    %420 = vmatprep.subr.bf16.mxu0 0
    %421 = vmatpush1.bf16.msra.mxu0 %v401
    %422 = vmatprep.subr.bf16.mxu0 0
    %423 = vmatpush1.bf16.msra.mxu0 %v402
    %424 = vmatprep.subr.bf16.mxu0 0
    %425 = vmatpush1.bf16.msra.mxu0 %v403
    %426 = vmatprep.subr.bf16.mxu0 0
    %427 = vmatpush1.bf16.msra.mxu0 %v404
    %428 = vmatprep.subr.bf16.mxu0 0
    %429 = vmatpush1.bf16.msra.mxu0 %v405
    %430 = vmatprep.subr.bf16.mxu0 0
    %431 = vmatpush1.bf16.msra.mxu0 0
    %432 = vmatprep.subr.bf16.mxu0 0
    %433 = vmatpush1.bf16.msra.mxu0 0
    %434 = vmatprep.subr.bf16.mxu0 0
    %435 = vmatpush1.bf16.msra.mxu0 0
    %436 = vmatprep.subr.bf16.mxu0 0
    %437 = vmatpush1.bf16.msra.mxu0 0
    %438 = vmatprep.subr.bf16.mxu0 0
    %439 = vmatpush1.bf16.msra.mxu0 0
    %440 = vmatprep.subr.bf16.mxu0 0
    %441 = vmatpush1.bf16.msra.mxu0 0
    %442 = vmatprep.subr.bf16.mxu0 0
    %443 = vmatpush1.bf16.msra.mxu0 0
    %444 = vmatprep.subr.bf16.mxu0 0
    %445 = vmatpush1.bf16.msra.mxu0 0
    %446 = vmatprep.mubr.bf16.mxu0 0
    %447 = vmatmul.mubr.bf16.gmra.mrb[0].mxu0 %v342
    %v448 = vpop.f32.mrb[0].mxu0
    %v449 = vadd.f32 %v364, %v448
    %v450 = vpop.f32.mrb[0].mxu0
    %v451 = vpop.f32.mrb[0].mxu0
    %v452 = vpop.f32.mrb[0].mxu0
    %453 = vdwg.mxu0
    %454 = vst [vmem:[%s11] sm:$0xff] %v449
    // Predicated region
    $region58: #{fc_forward.1} parent=1 // pred_check
      _
    $region59: #{fc_forward.1} parent=1 // pred_check_branch
      %456 = sbr.rel (0) target = $region61
    $region60: #{fc_forward.1} parent=1 // pred_region
      _
    $region61: #{fc_forward.1} parent=1 // pred_fallthru
      _
    // Predicated region
    $region62: #{fc_forward.1} parent=1 // pred_check
      _
    $region63: #{fc_forward.1} parent=1 // pred_check_branch
      %458 = sbr.rel (0) target = $region65
    $region64: #{fc_forward.1} parent=1 // pred_region
      _
    $region65: #{fc_forward.1} parent=1 // pred_fallthru
      _
    %459 = vsyncpa [#allocation3], 1
    %460 = vsyncpa [#allocation5], 1

</llo_original>
